<compile_context>
chip_gen: v6e
topology: v6e:2x2x1
jax: 0.10.0
libtpu: 0.0.40
codegen_flags: <defaults>
</compile_context>

<pallas_src>
import math
import functools

import jax
import jax.numpy as jnp
from jax.experimental import pallas as pl
from jax.experimental.pallas import tpu as pltpu


_SMALL_FALLBACK_ELEMS = 1 << 16          # below this, a kernel launch can't win
_VMEM_TARGET_BYTES = 16 * 1024 * 1024    # pipelined footprint target (all gens)
_VMEM_LIMIT_BYTES = 32 * 1024 * 1024     # explicit scoped-VMEM request


# ----------------------------- kernels ------------------------------------ #

def _pe_add_kernel(x_ref, pe_ref, o_ref, *, n_batch):
    # x_ref/o_ref: (tS, B*D) in x.dtype; pe_ref: (tS, D) in f32.
    # Broadcast pe across the B batch copies along the lane axis, add in f32.
    pe_b = jnp.tile(pe_ref[...], (1, n_batch))                 # (tS, B*D) f32
    y = x_ref[...].astype(jnp.float32) + pe_b
    o_ref[...] = y.astype(o_ref.dtype)


def _pe_add_dropout_kernel(x_ref, pe_ref, u_ref, o_ref, *, n_batch, p):
    # Inverted dropout: keep iff u >= p, scale survivors by 1/(1-p).
    pe_b = jnp.tile(pe_ref[...], (1, n_batch))                 # (tS, B*D) f32
    y = x_ref[...].astype(jnp.float32) + pe_b
    keep = u_ref[...] >= jnp.float32(p)
    scale = jnp.float32(1.0 / (1.0 - p))
    y = jnp.where(keep, y * scale, jnp.zeros_like(y))
    o_ref[...] = y.astype(o_ref.dtype)


# ------------------------- parameter / buffer setup ------------------------ #

def make_positional_encoding_table(max_len: int, d_model: int) -> jnp.ndarray:
    """Deterministic pe buffer, identical math to the PyTorch __init__.

    Returns pe of shape (max_len, 1, d_model), float32.
    """
    position = jnp.arange(0, max_len, dtype=jnp.float32)[:, None]           # (L, 1)
    div_term = jnp.exp(
        jnp.arange(0, d_model, 2, dtype=jnp.float32) * (-math.log(10000.0) / d_model)
    )                                                                        # (D/2,)
    angles = position * div_term                                             # (L, D/2)
    pe = jnp.zeros((max_len, d_model), dtype=jnp.float32)
    pe = pe.at[:, 0::2].set(jnp.sin(angles))
    pe = pe.at[:, 1::2].set(jnp.cos(angles))
    return pe[:, None, :]                                                    # (L, 1, D)


# ------------------------------ tile sizing -------------------------------- #

def _pick_tile_s(S: int, B: int, D: int, x_itemsize: int, with_rand: bool) -> int:
    """Rows of S per block so the double-buffered footprint stays ~16 MiB."""
    per_row = B * D * (2 * x_itemsize)          # x in + out
    per_row += D * 4                            # pe slab (f32)
    if with_rand:
        per_row += B * D * 4                    # uniform stream (f32)
    t_s = max(_VMEM_TARGET_BYTES // (2 * per_row), 8)   # 2 = double buffering
    t_s = min(t_s, S)
    if t_s < S:
        t_s = max((t_s // 8) * 8, 8)            # sublane alignment for partial tiles
    return t_s


# ------------------------------- wrapper ----------------------------------- #

def positional_encoding(x, pe, *, p: float = 0.1, train: bool = False,
                        rng_key=None, force_pallas: bool = False):
    """x: (S, B, D), pe: (max_len, 1, D).  Returns (S, B, D)."""
    S, B, D = x.shape
    if S > pe.shape[0]:
        raise ValueError("sequence longer than positional-encoding table")
    pe_s = pe[:S, 0, :].astype(jnp.float32)                    # (S, D), full precision

    use_dropout = train and p > 0.0
    if use_dropout and p >= 1.0:
        return jnp.zeros_like(x)
    if use_dropout and rng_key is None:
        rng_key = jax.random.PRNGKey(0)

    # Tiny tensors: a kernel launch + per-step grid overhead can't win; let XLA fuse.
    if (not force_pallas) and x.size < _SMALL_FALLBACK_ELEMS:
        y = (x.astype(jnp.float32) + pe_s[:, None, :])
        if use_dropout:
            u = jax.random.uniform(rng_key, y.shape, dtype=jnp.float32)
            y = jnp.where(u >= p, y * (1.0 / (1.0 - p)), 0.0)
        return y.astype(x.dtype)

    # ---- Pallas path: lane-dense (S, B*D) layout, 1-D grid over S ---- #
    x2 = x.reshape(S, B * D)
    t_s = _pick_tile_s(S, B, D, x.dtype.itemsize, use_dropout)
    grid = (pl.cdiv(S, t_s),)

    x_spec = pl.BlockSpec((t_s, B * D), lambda i: (i, 0))
    pe_spec = pl.BlockSpec((t_s, D), lambda i: (i, 0))
    out_spec = pl.BlockSpec((t_s, B * D), lambda i: (i, 0))
    out_shape = jax.ShapeDtypeStruct((S, B * D), x.dtype)
    cparams = pltpu.CompilerParams(
        dimension_semantics=("parallel",),          # megacore sharding on v7x
        vmem_limit_bytes=_VMEM_LIMIT_BYTES,
    )

    if not use_dropout:
        y2 = pl.pallas_call(
            functools.partial(_pe_add_kernel, n_batch=B),
            out_shape=out_shape,
            grid=grid,
            in_specs=[x_spec, pe_spec],
            out_specs=out_spec,
            input_output_aliases={0: 0},            # x is dead after the add
            compiler_params=cparams,
        )(x2, pe_s)
        return y2.reshape(S, B, D)

    # Training: precomputed uniform stream (see TODO(synk) above).
    u = jax.random.uniform(rng_key, (S, B * D), dtype=jnp.float32)
    y2 = pl.pallas_call(
        functools.partial(_pe_add_dropout_kernel, n_batch=B, p=float(p)),
        out_shape=out_shape,
        grid=grid,
        in_specs=[x_spec, pe_spec, x_spec],
        out_specs=out_spec,
        input_output_aliases={0: 0},
        compiler_params=cparams,
    )(x2, pe_s, u)
    return y2.reshape(S, B, D)


# --------------------------------- main ------------------------------------ #

if __name__ == "__main__":
    # Small shapes consistent with the module: seq=8, batch=2, d_model=32.
    S, B, D = 8, 2, 32
    MAX_LEN = 64
    P_DROP = 0.1

    key = jax.random.PRNGKey(0)
    x = jax.random.normal(key, (S, B, D), dtype=jnp.float32)
    pe = make_positional_encoding_table(MAX_LEN, D)

    # Reference (eval mode): plain broadcast add.
    y_ref = x + pe[:S]

    # Eval-mode forward through the Pallas kernel.
    y_eval = positional_encoding(x, pe, p=P_DROP, train=False, force_pallas=True)
    y_eval = jax.block_until_ready(y_eval)
    assert y_eval.shape == (S, B, D)
    assert jnp.allclose(y_eval, y_ref, atol=1e-6, rtol=1e-6), "eval mismatch"

    # Training-mode forward (inverted dropout).  The uniform stream is
    # deterministic given the key, so we can check exactly.
    drop_key = jax.random.PRNGKey(1234)
    y_train = positional_encoding(x, pe, p=P_DROP, train=True,
                                  rng_key=drop_key, force_pallas=True)
    y_train = jax.block_until_ready(y_train)
    assert y_train.shape == (S, B, D)

    u_ref = jax.random.uniform(drop_key, (S, B * D), dtype=jnp.float32).reshape(S, B, D)
    train_ref = jnp.where(u_ref >= P_DROP, y_ref / (1.0 - P_DROP), 0.0)
    assert jnp.allclose(y_train, train_ref, atol=1e-5, rtol=1e-5), "train mismatch"

    # Sanity: every surviving element equals (x + pe)/(1-p); dropped ones are 0.
    ok = jnp.logical_or(jnp.isclose(y_train, y_ref / (1.0 - P_DROP), atol=1e-5),
                        y_train == 0.0)
    assert bool(jnp.all(ok)), "train-mode dropout values out of range"

    print("KERNEL_OK")
</pallas_src>

<mosaic_0001>
module attributes {stable_mosaic.version = 11 : i64} {
  func.func @_pe_add_kernel(%arg0: i32, %arg1: memref<8x64xf32, #tpu.memory_space<vmem>>, %arg2: memref<8x32xf32, #tpu.memory_space<vmem>>, %arg3: memref<8x64xf32, #tpu.memory_space<vmem>>) attributes {dimension_semantics = [#tpu.dimension_semantics<parallel>], iteration_bounds = array<i64: 1>, scalar_prefetch = 0 : i64, scratch_operands = 0 : i64, tpu.core_type = #tpu.core_type<tc>, window_params = [{transform_indices = @transform_0, window_bounds = array<i64: 8, 64>}, {transform_indices = @transform_1, window_bounds = array<i64: 8, 32>}, {transform_indices = @transform_2, window_bounds = array<i64: 8, 64>}]} {
    %c0 = arith.constant 0 : index
    %c0_0 = arith.constant 0 : index
    %0 = vector.load %arg2[%c0, %c0_0] : memref<8x32xf32, #tpu.memory_space<vmem>>, vector<8x32xf32>
    %1 = tpu.concatenate %0, %0 in 1 : vector<8x32xf32>, vector<8x32xf32> -> vector<8x64xf32>
    %c0_1 = arith.constant 0 : index
    %c0_2 = arith.constant 0 : index
    %2 = vector.load %arg1[%c0_1, %c0_2] : memref<8x64xf32, #tpu.memory_space<vmem>>, vector<8x64xf32>
    %3 = arith.addf %2, %1 : vector<8x64xf32>
    %c0_3 = arith.constant 0 : index
    %c0_4 = arith.constant 0 : index
    %4 = vector.load %arg3[%c0_3, %c0_4] : memref<8x64xf32, #tpu.memory_space<vmem>>, vector<8x64xf32>
    tpu.vector_store %arg3[%c0_3, %c0_4], %3 {strides = array<i32>} : memref<8x64xf32, #tpu.memory_space<vmem>>, vector<8x64xf32>,
    return
  }
  func.func @transform_0(%arg0: i32) -> (i32, i32) {
    %c0_i32 = arith.constant 0 : i32
    %c0_i32_0 = arith.constant 0 : i32
    return %arg0, %c0_i32 : i32, i32
  }
  func.func @transform_1(%arg0: i32) -> (i32, i32) {
    %c0_i32 = arith.constant 0 : i32
    %c0_i32_0 = arith.constant 0 : i32
    return %arg0, %c0_i32 : i32, i32
  }
  func.func @transform_2(%arg0: i32) -> (i32, i32) {
    %c0_i32 = arith.constant 0 : i32
    %c0_i32_0 = arith.constant 0 : i32
    return %arg0, %c0_i32 : i32, i32
  }
}

</mosaic_0001>

<llo_original>
// kernel: tpu_custom_call.1
$region0: #{tpu_custom_call.1}
  #allocation0 [shape = 'u32[]', space=smem, size = 0x4, offset = 0x4, fixed_abs, tag = 'smem constant byte address 0x4 - core index']
  #allocation1 [shape = 'u32[144,128]{1,0:T(1,128)}', space=vmem, size = 0x12000, scoped, tag = 'internal scratch']
  %s0 = inlined_call_operand.hbm [shape: f32[8,64], index: 0, kind: input, shape index: {}, may-alias: {0,2}]
  %s1 = inlined_call_operand.vmem [shape: f32[8,32], index: 1, kind: input, shape index: {}]
  %s2 = inlined_call_operand.hbm [shape: f32[8,64], index: 2, kind: output, shape index: {}, may-alias: {0,2}]
  %s3 = sld [smem:[#allocation0]]
  $region22: #{tpu_custom_call.1} parent=0
    _
  %s5 = ssub.s32 1, %s3
  %s6 = scalar_select 0, %s5, %s3
  $region1: #{tpu_custom_call.1} parent=0
    #allocation2 [shape = 'u8[4096]{0}', space=vmem, size = 0x1000, scoped, tag = 'input window, operand 0, single buffered']
    #allocation3 [shape = 's32[1]{0}', space=sflag, size = 0x4, scoped, tag = 'scoped memory for tpu_custom_call.1']
    #allocation4 [shape = 's32[1]{0}', space=sflag, size = 0x4, scoped, tag = 'scoped memory for tpu_custom_call.1']
    #allocation5 [shape = 'u8[4096]{0}', space=vmem, size = 0x1000, scoped, tag = 'output window, operand 0, single buffered']
    %7 = vsyncpa [#allocation3], 0
    %8 = vsyncpa [#allocation4], 0
    // Predicated region
    $region2: #{tpu_custom_call.1} parent=1 // pred_check
      _
    $region3: #{tpu_custom_call.1} parent=1 // pred_check_branch
      %10 = sbr.rel (0) target = $region5
    $region4: #{tpu_custom_call.1} parent=1 // pred_region
      %s12 = ssub.s32 128, 128
      %13 = vsyncadd [#allocation3], %s12
      %s15 = sshll.u32 [#allocation2], 4
      %s16 = int_to_ptr.vmem [resolvable:$true] %s15
      %18 = dma.hbm_to_vmem [thread:$0]  %s0, 128, %s16, [#allocation3]
    $region5: #{tpu_custom_call.1} parent=1 // pred_fallthru
      _
    // Predicated region
    $region6: #{tpu_custom_call.1} parent=1 // pred_check
      _
    $region7: #{tpu_custom_call.1} parent=1 // pred_check_branch
      %20 = sbr.rel (0) target = $region9
    $region8: #{tpu_custom_call.1} parent=1 // pred_region
      _
    $region9: #{tpu_custom_call.1} parent=1 // pred_fallthru
      _
    // Predicated region
    $region10: #{tpu_custom_call.1} parent=1 // pred_check
      _
    $region11: #{tpu_custom_call.1} parent=1 // pred_check_branch
      %22 = sbr.rel (0) target = $region13
    $region12: #{tpu_custom_call.1} parent=1 // pred_region
      %23 = dma.done [#allocation3], 128
    $region13: #{tpu_custom_call.1} parent=1 // pred_fallthru
      _
    %v24 = vld [vmem:[%s1] sm:$0xff]
    %26 = vrot.lane.b32.xlu0 %v24, 32
    %v27 = vpop.permute.xlu0 %26
    %vm29 = vcmask 261120
    %v30 = vsel %vm29, %v24, %v27
    %v31 = vld [vmem:[#allocation2] sm:$0xff]
    %v32 = vadd.f32 %v31, %v30
    %vm33 = vcmask 523264
    %34 = vst.msk [vmem:[#allocation5] sm:$0xff] %vm33, %v32
    // Predicated region
    $region14: #{tpu_custom_call.1} parent=1 // pred_check
      _
    $region15: #{tpu_custom_call.1} parent=1 // pred_check_branch
      %36 = sbr.rel (0) target = $region17
    $region16: #{tpu_custom_call.1} parent=1 // pred_region
      %s38 = ssub.s32 128, 128
      %39 = vsyncadd [#allocation4], %s38
      %s41 = sshll.u32 [#allocation5], 4
      %s42 = int_to_ptr.vmem [resolvable:$true] %s41
      %44 = dma.vmem_to_hbm [thread:$0]  %s42, 128, %s2, [#allocation4]
    $region17: #{tpu_custom_call.1} parent=1 // pred_fallthru
      _
    // Predicated region
    $region18: #{tpu_custom_call.1} parent=1 // pred_check
      _
    $region19: #{tpu_custom_call.1} parent=1 // pred_check_branch
      %46 = sbr.rel (0) target = $region21
    $region20: #{tpu_custom_call.1} parent=1 // pred_region
      %47 = dma.done [#allocation4], 128
    $region21: #{tpu_custom_call.1} parent=1 // pred_fallthru
      _
    %48 = vsyncpa [#allocation3], 1
    %49 = vsyncpa [#allocation4], 1

</llo_original>
